<compile_context>
chip_gen: v7x
topology: tpu7x:2x2x1
jax: 0.10.0
libtpu: 0.0.40
codegen_flags: <defaults>
</compile_context>

<pallas_src>
import math
import jax
import jax.numpy as jnp
from jax.experimental import pallas as pl
from jax.experimental.pallas import tpu as pltpu

HIDDEN = 64


# ---------------------------------------------------------------------------
# Kernel: fused Actor forward on one [TB, in_dim] row tile.
# ---------------------------------------------------------------------------
def actor_kernel(x_ref, w1_ref, b1_ref, w2_ref, b2_ref, w3_ref, b3_ref,
                 std_ref, eps_ref, out_ref):
    x = x_ref[...]                                   # [TB, in_dim] f32
    tb = x.shape[0]
    in_dim = x.shape[1]
    out_dim = eps_ref.shape[1]
    pack_w = out_ref.shape[1]

    # ---- Layer 1: K = in_dim (tiny) -> VPU broadcast-FMAs, skip the MXU. ----
    pre1 = x[:, 0:1] * w1_ref[0:1, :]                # [TB, 64]
    for k in range(1, in_dim):                       # static unroll (in_dim is tiny)
        pre1 = pre1 + x[:, k:k + 1] * w1_ref[k:k + 1, :]
    h1 = jnp.tanh(pre1 + b1_ref[...])

    # ---- Layer 2: 64x64 -> MXU with f32 accumulation. ----
    h2 = jnp.tanh(
        jnp.dot(h1, w2_ref[...], preferred_element_type=jnp.float32) + b2_ref[...]
    )                                                # [TB, 64]

    # ---- Layer 3: N = out_dim (tiny) -> VPU multiply + lane reduce (XLU). ----
    mu_cols = [
        jnp.sum(h2 * w3_ref[j:j + 1, :], axis=1, keepdims=True)   # [TB, 1]
        for j in range(out_dim)
    ]
    mu = mu_cols[0] if out_dim == 1 else jnp.concatenate(mu_cols, axis=1)
    mu = mu + b3_ref[...]                            # [TB, out_dim]

    # ---- Reparameterized sample + squashing (std is computed outside). ----
    raw = mu + std_ref[...] * eps_ref[...]           # rsample
    tanh_action = jnp.tanh(raw) * 2.0

    # ---- Single lane-dense packed store: one output buffer, unmasked vst. ----
    lane = jax.lax.broadcasted_iota(jnp.int32, (tb, pack_w), 1)
    packed = jnp.zeros((tb, pack_w), jnp.float32)
    for j in range(out_dim):
        packed = jnp.where(lane == j, tanh_action[:, j:j + 1], packed)
        packed = jnp.where(lane == out_dim + j, raw[:, j:j + 1], packed)
        packed = jnp.where(lane == 2 * out_dim + j, mu[:, j:j + 1], packed)
    out_ref[...] = packed


# ---------------------------------------------------------------------------
# Wrapper: batch-gridded pallas_call; no per-call transposes, std kept outside.
# ---------------------------------------------------------------------------
def actor_forward(x, params, eps, *, block_b=1024):
    """x: [B, in_dim] f32, eps: [B, out_dim] f32 standard-normal noise.

    Returns (tanh_action [B,out], raw_action [B,out], mu [B,out], std [1,out]).
    """
    B, in_dim = x.shape
    out_dim = params["w3"].shape[0]

    # std depends only on log_std -> scalar-sized exp/clip, keep it out of the kernel.
    std = jnp.clip(jnp.exp(params["log_std"]), 0.001, 2.0)       # [1, out_dim]

    # Batch tiling: single block for small B, otherwise `block_b`-row parallel tiles.
    if B <= block_b:
        tb, bp = B, B
    else:
        tb = block_b
        bp = pl.cdiv(B, tb) * tb
    x_in, eps_in = x, eps
    if bp != B:
        x_in = jnp.pad(x, ((0, bp - B), (0, 0)))
        eps_in = jnp.pad(eps, ((0, bp - B), (0, 0)))

    pack_w = max(128, ((3 * out_dim + 127) // 128) * 128)        # lane-dense slab width

    def const2(shape):
        return pl.BlockSpec(shape, lambda i: (0, 0))

    packed = pl.pallas_call(
        actor_kernel,
        grid=(bp // tb,),
        in_specs=[
            pl.BlockSpec((tb, in_dim), lambda i: (i, 0)),        # x
            const2((in_dim, HIDDEN)),                            # w1  [in, 64]
            const2((1, HIDDEN)),                                 # b1
            const2((HIDDEN, HIDDEN)),                            # w2  [64, 64]
            const2((1, HIDDEN)),                                 # b2
            const2((out_dim, HIDDEN)),                           # w3  [out, 64] (PyTorch layout)
            const2((1, out_dim)),                                # b3
            const2((1, out_dim)),                                # std
            pl.BlockSpec((tb, out_dim), lambda i: (i, 0)),       # eps
        ],
        out_specs=pl.BlockSpec((tb, pack_w), lambda i: (i, 0)),
        out_shape=jax.ShapeDtypeStruct((bp, pack_w), jnp.float32),
        compiler_params=pltpu.CompilerParams(
            dimension_semantics=("parallel",)),
    )(x_in, params["w1t"], params["b1"], params["w2t"], params["b2"],
      params["w3"], params["b3"], std, eps_in)

    tanh_action = packed[:B, 0:out_dim]
    raw_action = packed[:B, out_dim:2 * out_dim]
    mu = packed[:B, 2 * out_dim:3 * out_dim]
    # NOTE: std is [1, out_dim] (PyTorch Normal.scale is [out_dim]); broadcast-equal.
    return tanh_action, raw_action, mu, std


# ---------------------------------------------------------------------------
# Deterministic parameter init (mirrors PyTorch orthogonal_init + zero bias).
# Weights are stored ONCE in kernel-ready layout (no per-call transposes).
# ---------------------------------------------------------------------------
def orthogonal(key, shape, gain):
    rows, cols = shape
    n, m = max(rows, cols), min(rows, cols)
    a = jax.random.normal(key, (n, m), dtype=jnp.float32)
    q, r = jnp.linalg.qr(a)
    q = q * jnp.sign(jnp.diagonal(r))[None, :]
    if rows < cols:
        q = q.T
    return (gain * q[:rows, :cols]).astype(jnp.float32)


def make_params(key, in_dim, out_dim):
    k1, k2, k3 = jax.random.split(key, 3)
    return {
        "w1t": orthogonal(k1, (HIDDEN, in_dim), math.sqrt(2)).T,   # [in_dim, 64]
        "b1": jnp.zeros((1, HIDDEN), jnp.float32),
        "w2t": orthogonal(k2, (HIDDEN, HIDDEN), math.sqrt(2)).T,   # [64, 64]
        "b2": jnp.zeros((1, HIDDEN), jnp.float32),
        "w3": orthogonal(k3, (out_dim, HIDDEN), 0.01),             # [out_dim, 64]
        "b3": jnp.zeros((1, out_dim), jnp.float32),
        "log_std": jnp.zeros((1, out_dim), jnp.float32),
    }


def actor_reference(x, params, eps):
    h1 = jnp.tanh(x @ params["w1t"] + params["b1"])
    h2 = jnp.tanh(h1 @ params["w2t"] + params["b2"])
    mu = h2 @ params["w3"].T + params["b3"]
    std = jnp.clip(jnp.exp(params["log_std"]), 0.001, 2.0)
    raw = mu + std * eps
    return jnp.tanh(raw) * 2.0, raw, mu, std


if __name__ == "__main__":
    key = jax.random.PRNGKey(0)
    k_param, k_x, k_eps = jax.random.split(key, 3)

    B, in_dim, out_dim = 8, 3, 1          # Pendulum-like: obs dim 3, action dim 1
    params = make_params(k_param, in_dim, out_dim)
    x = jax.random.normal(k_x, (B, in_dim), dtype=jnp.float32)
    eps = jax.random.normal(k_eps, (B, out_dim), dtype=jnp.float32)

    fwd = jax.jit(actor_forward)
    outs = jax.block_until_ready(fwd(x, params, eps))

    refs = actor_reference(x, params, eps)
    for o, r in zip(outs, refs):
        assert o.shape == r.shape, (o.shape, r.shape)
        assert jnp.allclose(o, r, atol=1e-4, rtol=1e-4), (o, r)

    print("KERNEL_OK")
</pallas_src>

<mosaic_0001>
module attributes {stable_mosaic.version = 11 : i64} {
  func.func @actor_kernel(%arg0: i32, %arg1: memref<8x3xf32, #tpu.memory_space<vmem>>, %arg2: memref<3x64xf32, #tpu.memory_space<vmem>>, %arg3: memref<1x64xf32, #tpu.memory_space<vmem>>, %arg4: memref<64x64xf32, #tpu.memory_space<vmem>>, %arg5: memref<1x64xf32, #tpu.memory_space<vmem>>, %arg6: memref<1x64xf32, #tpu.memory_space<vmem>>, %arg7: memref<1x1xf32, #tpu.memory_space<vmem>>, %arg8: memref<1x1xf32, #tpu.memory_space<vmem>>, %arg9: memref<8x1xf32, #tpu.memory_space<vmem>>, %arg10: memref<8x128xf32, #tpu.memory_space<vmem>>) attributes {dimension_semantics = [#tpu.dimension_semantics<parallel>], iteration_bounds = array<i64: 1>, scalar_prefetch = 0 : i64, scratch_operands = 0 : i64, tpu.core_type = #tpu.core_type<tc>, window_params = [{transform_indices = @transform_0, window_bounds = array<i64: 8, 3>}, {pipeline_mode = #tpu.pipeline_mode<synchronous>, transform_indices = @transform_1, window_bounds = array<i64: 3, 64>}, {pipeline_mode = #tpu.pipeline_mode<synchronous>, transform_indices = @transform_2, window_bounds = array<i64: 1, 64>}, {pipeline_mode = #tpu.pipeline_mode<synchronous>, transform_indices = @transform_3, window_bounds = array<i64: 64, 64>}, {pipeline_mode = #tpu.pipeline_mode<synchronous>, transform_indices = @transform_4, window_bounds = array<i64: 1, 64>}, {pipeline_mode = #tpu.pipeline_mode<synchronous>, transform_indices = @transform_5, window_bounds = array<i64: 1, 64>}, {pipeline_mode = #tpu.pipeline_mode<synchronous>, transform_indices = @transform_6, window_bounds = array<i64: 1, 1>}, {pipeline_mode = #tpu.pipeline_mode<synchronous>, transform_indices = @transform_7, window_bounds = array<i64: 1, 1>}, {transform_indices = @transform_8, window_bounds = array<i64: 8, 1>}, {transform_indices = @transform_9, window_bounds = array<i64: 8, 128>}]} {
    %c0 = arith.constant 0 : index
    %c0_0 = arith.constant 0 : index
    %0 = vector.load %arg1[%c0, %c0_0] : memref<8x3xf32, #tpu.memory_space<vmem>>, vector<8x3xf32>
    %1 = vector.extract_strided_slice %0 {offsets = [0, 0], sizes = [8, 1], strides = [1, 1]} : vector<8x3xf32> to vector<8x1xf32>
    %c0_1 = arith.constant 0 : index
    %c0_2 = arith.constant 0 : index
    %2 = vector.load %arg2[%c0_1, %c0_2] : memref<3x64xf32, #tpu.memory_space<vmem>>, vector<1x64xf32>
    %3 = vector.broadcast %1 : vector<8x1xf32> to vector<8x64xf32>
    %4 = vector.broadcast %2 : vector<1x64xf32> to vector<8x64xf32>
    %5 = arith.mulf %3, %4 : vector<8x64xf32>
    %6 = vector.extract_strided_slice %0 {offsets = [0, 1], sizes = [8, 1], strides = [1, 1]} : vector<8x3xf32> to vector<8x1xf32>
    %c1 = arith.constant 1 : index
    %c0_3 = arith.constant 0 : index
    %7 = vector.load %arg2[%c1, %c0_3] : memref<3x64xf32, #tpu.memory_space<vmem>>, vector<1x64xf32>
    %8 = vector.broadcast %6 : vector<8x1xf32> to vector<8x64xf32>
    %9 = vector.broadcast %7 : vector<1x64xf32> to vector<8x64xf32>
    %10 = arith.mulf %8, %9 : vector<8x64xf32>
    %11 = arith.addf %5, %10 : vector<8x64xf32>
    %12 = vector.extract_strided_slice %0 {offsets = [0, 2], sizes = [8, 1], strides = [1, 1]} : vector<8x3xf32> to vector<8x1xf32>
    %c2 = arith.constant 2 : index
    %c0_4 = arith.constant 0 : index
    %13 = vector.load %arg2[%c2, %c0_4] : memref<3x64xf32, #tpu.memory_space<vmem>>, vector<1x64xf32>
    %14 = vector.broadcast %12 : vector<8x1xf32> to vector<8x64xf32>
    %15 = vector.broadcast %13 : vector<1x64xf32> to vector<8x64xf32>
    %16 = arith.mulf %14, %15 : vector<8x64xf32>
    %17 = arith.addf %11, %16 : vector<8x64xf32>
    %c0_5 = arith.constant 0 : index
    %c0_6 = arith.constant 0 : index
    %18 = vector.load %arg3[%c0_5, %c0_6] : memref<1x64xf32, #tpu.memory_space<vmem>>, vector<1x64xf32>
    %19 = vector.broadcast %18 : vector<1x64xf32> to vector<8x64xf32>
    %20 = arith.addf %17, %19 : vector<8x64xf32>
    %21 = math.tanh %20 : vector<8x64xf32>
    %c0_7 = arith.constant 0 : index
    %c0_8 = arith.constant 0 : index
    %22 = vector.load %arg4[%c0_7, %c0_8] : memref<64x64xf32, #tpu.memory_space<vmem>>, vector<64x64xf32>
    %cst = arith.constant dense<0.000000e+00> : vector<8x64xf32>
    %23 = tpu.matmul %21, %22, %cst {dimension_numbers = #tpu.dot_dimension_numbers<[1], [0], [0], [1], [0, 0, 1, 1], [], []>} : vector<8x64xf32>, vector<64x64xf32>, vector<8x64xf32> -> vector<8x64xf32>
    %c0_9 = arith.constant 0 : index
    %c0_10 = arith.constant 0 : index
    %24 = vector.load %arg5[%c0_9, %c0_10] : memref<1x64xf32, #tpu.memory_space<vmem>>, vector<1x64xf32>
    %25 = vector.broadcast %24 : vector<1x64xf32> to vector<8x64xf32>
    %26 = arith.addf %23, %25 : vector<8x64xf32>
    %27 = math.tanh %26 : vector<8x64xf32>
    %c0_11 = arith.constant 0 : index
    %c0_12 = arith.constant 0 : index
    %28 = vector.load %arg6[%c0_11, %c0_12] : memref<1x64xf32, #tpu.memory_space<vmem>>, vector<1x64xf32>
    %29 = vector.broadcast %28 : vector<1x64xf32> to vector<8x64xf32>
    %30 = arith.mulf %27, %29 : vector<8x64xf32>
    %cst_13 = arith.constant dense<0.000000e+00> : vector<8xf32>
    %31 = vector.multi_reduction <add>, %30, %cst_13 [1] : vector<8x64xf32> to vector<8xf32>
    %32 = vector.shape_cast %31 : vector<8xf32> to vector<8x1xf32>
    %c0_14 = arith.constant 0 : index
    %c0_15 = arith.constant 0 : index
    %33 = vector.load %arg7[%c0_14, %c0_15] : memref<1x1xf32, #tpu.memory_space<vmem>>, vector<1x1xf32>
    %34 = vector.broadcast %33 : vector<1x1xf32> to vector<8x1xf32>
    %35 = arith.addf %32, %34 : vector<8x1xf32>
    %c0_16 = arith.constant 0 : index
    %c0_17 = arith.constant 0 : index
    %36 = vector.load %arg8[%c0_16, %c0_17] : memref<1x1xf32, #tpu.memory_space<vmem>>, vector<1x1xf32>
    %c0_18 = arith.constant 0 : index
    %c0_19 = arith.constant 0 : index
    %37 = vector.load %arg9[%c0_18, %c0_19] : memref<8x1xf32, #tpu.memory_space<vmem>>, vector<8x1xf32>
    %38 = vector.broadcast %36 : vector<1x1xf32> to vector<8x1xf32>
    %39 = arith.mulf %38, %37 : vector<8x1xf32>
    %40 = arith.addf %35, %39 : vector<8x1xf32>
    %41 = math.tanh %40 : vector<8x1xf32>
    %cst_20 = arith.constant 2.000000e+00 : f32
    %42 = vector.broadcast %cst_20 : f32 to vector<8x1xf32>
    %43 = arith.mulf %41, %42 : vector<8x1xf32>
    %44 = tpu.iota {dimensions = array<i32: 1>} : vector<8x128xi32>
    %cst_21 = arith.constant 0.000000e+00 : f32
    %45 = vector.broadcast %cst_21 : f32 to vector<8x128xf32>
    %c0_i32 = arith.constant 0 : i32
    %46 = vector.broadcast %c0_i32 : i32 to vector<8x128xi32>
    %47 = arith.cmpi eq, %44, %46 : vector<8x128xi32>
    %48 = vector.shape_cast %43 : vector<8x1xf32> to vector<8x1xf32>
    %49 = vector.broadcast %48 : vector<8x1xf32> to vector<8x128xf32>
    %50 = arith.select %47, %49, %45 : vector<8x128xi1>, vector<8x128xf32>
    %c1_i32 = arith.constant 1 : i32
    %51 = vector.broadcast %c1_i32 : i32 to vector<8x128xi32>
    %52 = arith.cmpi eq, %44, %51 : vector<8x128xi32>
    %53 = vector.shape_cast %40 : vector<8x1xf32> to vector<8x1xf32>
    %54 = vector.broadcast %53 : vector<8x1xf32> to vector<8x128xf32>
    %55 = arith.select %52, %54, %50 : vector<8x128xi1>, vector<8x128xf32>
    %c2_i32 = arith.constant 2 : i32
    %56 = vector.broadcast %c2_i32 : i32 to vector<8x128xi32>
    %57 = arith.cmpi eq, %44, %56 : vector<8x128xi32>
    %58 = vector.shape_cast %35 : vector<8x1xf32> to vector<8x1xf32>
    %59 = vector.broadcast %58 : vector<8x1xf32> to vector<8x128xf32>
    %60 = arith.select %57, %59, %55 : vector<8x128xi1>, vector<8x128xf32>
    %c0_22 = arith.constant 0 : index
    %c0_23 = arith.constant 0 : index
    %61 = vector.load %arg10[%c0_22, %c0_23] : memref<8x128xf32, #tpu.memory_space<vmem>>, vector<8x128xf32>
    tpu.vector_store %arg10[%c0_22, %c0_23], %60 {strides = array<i32>} : memref<8x128xf32, #tpu.memory_space<vmem>>, vector<8x128xf32>,
    return
  }
  func.func @transform_0(%arg0: i32) -> (i32, i32) {
    %c0_i32 = arith.constant 0 : i32
    %c0_i32_0 = arith.constant 0 : i32
    return %arg0, %c0_i32 : i32, i32
  }
  func.func @transform_1(%arg0: i32) -> (i32, i32) {
    %c0_i32 = arith.constant 0 : i32
    %c0_i32_0 = arith.constant 0 : i32
    %c0_i32_1 = arith.constant 0 : i32
    return %c0_i32, %c0_i32_0 : i32, i32
  }
  func.func @transform_2(%arg0: i32) -> (i32, i32) {
    %c0_i32 = arith.constant 0 : i32
    %c0_i32_0 = arith.constant 0 : i32
    %c0_i32_1 = arith.constant 0 : i32
    return %c0_i32, %c0_i32_0 : i32, i32
  }
  func.func @transform_3(%arg0: i32) -> (i32, i32) {
    %c0_i32 = arith.constant 0 : i32
    %c0_i32_0 = arith.constant 0 : i32
    %c0_i32_1 = arith.constant 0 : i32
    return %c0_i32, %c0_i32_0 : i32, i32
  }
  func.func @transform_4(%arg0: i32) -> (i32, i32) {
    %c0_i32 = arith.constant 0 : i32
    %c0_i32_0 = arith.constant 0 : i32
    %c0_i32_1 = arith.constant 0 : i32
    return %c0_i32, %c0_i32_0 : i32, i32
  }
  func.func @transform_5(%arg0: i32) -> (i32, i32) {
    %c0_i32 = arith.constant 0 : i32
    %c0_i32_0 = arith.constant 0 : i32
    %c0_i32_1 = arith.constant 0 : i32
    return %c0_i32, %c0_i32_0 : i32, i32
  }
  func.func @transform_6(%arg0: i32) -> (i32, i32) {
    %c0_i32 = arith.constant 0 : i32
    %c0_i32_0 = arith.constant 0 : i32
    %c0_i32_1 = arith.constant 0 : i32
    return %c0_i32, %c0_i32_0 : i32, i32
  }
  func.func @transform_7(%arg0: i32) -> (i32, i32) {
    %c0_i32 = arith.constant 0 : i32
    %c0_i32_0 = arith.constant 0 : i32
    %c0_i32_1 = arith.constant 0 : i32
    return %c0_i32, %c0_i32_0 : i32, i32
  }
  func.func @transform_8(%arg0: i32) -> (i32, i32) {
    %c0_i32 = arith.constant 0 : i32
    %c0_i32_0 = arith.constant 0 : i32
    return %arg0, %c0_i32 : i32, i32
  }
  func.func @transform_9(%arg0: i32) -> (i32, i32) {
    %c0_i32 = arith.constant 0 : i32
    %c0_i32_0 = arith.constant 0 : i32
    return %arg0, %c0_i32 : i32, i32
  }
}

</mosaic_0001>

<llo_original>
// kernel: actor_forward.1
$region0: #{actor_forward.1}
  #allocation0 [shape = 'u32[]', space=smem, size = 0x4, offset = 0x4, fixed_abs, tag = 'smem constant byte address 0x4 - core index']
  #allocation1 [shape = 'u32[144,128]{1,0:T(1,128)}', space=vmem, size = 0x12000, scoped, tag = 'internal scratch']
  #allocation2 [shape = 'f32[1,1]{1,0:T(1,128)S(1)}', space=vmem, size = 0x200, scoped, tag = 'scoped memory for actor_forward.1']
  #allocation3 [shape = 'f32[1,1]{1,0:T(1,128)S(1)}', space=vmem, size = 0x200, scoped, tag = 'scoped memory for actor_forward.1']
  %s0 = inlined_call_operand.vmem [shape: f32[8,3], index: 0, kind: input, shape index: {}]
  %s1 = inlined_call_operand.vmem [shape: f32[3,64], index: 1, kind: input, shape index: {}]
  %s2 = inlined_call_operand.vmem [shape: f32[1,64], index: 2, kind: input, shape index: {}]
  %s3 = inlined_call_operand.hbm [shape: f32[64,64], index: 3, kind: input, shape index: {}]
  %s4 = inlined_call_operand.vmem [shape: f32[1,64], index: 4, kind: input, shape index: {}]
  %s5 = inlined_call_operand.vmem [shape: f32[1,64], index: 5, kind: input, shape index: {}]
  %s6 = inlined_call_operand.<no memory space> [shape: f32[1,1], index: 6, kind: input, shape index: {}]
  %s7 = inlined_call_operand.<no memory space> [shape: f32[1,1], index: 7, kind: input, shape index: {}]
  %s8 = inlined_call_operand.vmem [shape: f32[8,1], index: 8, kind: input, shape index: {}]
  %s9 = inlined_call_operand.vmem [shape: f32[8,128], index: 9, kind: output, shape index: {}]
  %s10 = sld [smem:[#allocation0]]
  $region50: #{actor_forward.1} parent=0
    _
  %s12 = ssub.s32 1, %s10
  %s13 = scalar_select 0, %s12, %s10
  %v14 = vstv %s6
  %15 = vst [vmem:[#allocation2] sm:$0x1] %v14
  %v16 = vstv %s7
  %17 = vst [vmem:[#allocation3] sm:$0x1] %v16
  $region1: #{actor_forward.1} parent=0
    #allocation4 [shape = 'u8[32768]{0}', space=vmem, size = 0x8000, scoped, tag = 'input window, operand 3, single buffered']
    #allocation5 [shape = 's32[1]{0}', space=sflag, size = 0x4, scoped, tag = 'scoped memory for actor_forward.1']
    %18 = vsyncpa [#allocation5], 0
    // Predicated region
    $region2: #{actor_forward.1} parent=1 // pred_check
      _
    $region3: #{actor_forward.1} parent=1 // pred_check_branch
      %20 = sbr.rel (0) target = $region5
    $region4: #{actor_forward.1} parent=1 // pred_region
      _
    $region5: #{actor_forward.1} parent=1 // pred_fallthru
      _
    // Predicated region
    $region6: #{actor_forward.1} parent=1 // pred_check
      _
    $region7: #{actor_forward.1} parent=1 // pred_check_branch
      %22 = sbr.rel (0) target = $region9
    $region8: #{actor_forward.1} parent=1 // pred_region
      _
    $region9: #{actor_forward.1} parent=1 // pred_fallthru
      _
    // Predicated region
    $region10: #{actor_forward.1} parent=1 // pred_check
      _
    $region11: #{actor_forward.1} parent=1 // pred_check_branch
      %24 = sbr.rel (0) target = $region13
    $region12: #{actor_forward.1} parent=1 // pred_region
      _
    $region13: #{actor_forward.1} parent=1 // pred_fallthru
      _
    // Predicated region
    $region14: #{actor_forward.1} parent=1 // pred_check
      _
    $region15: #{actor_forward.1} parent=1 // pred_check_branch
      %26 = sbr.rel (0) target = $region17
    $region16: #{actor_forward.1} parent=1 // pred_region
      %s28 = ssub.s32 1024, 1024
      %29 = vsyncadd [#allocation5], %s28
      %s30 = sshll.u32 [#allocation4], 4
      %s31 = int_to_ptr.vmem [resolvable:$true] %s30
      %36 = dma.hbm_to_vmem [thread:$0]  %s3, 1024, %s31, [#allocation5], 128, 128, 8
    $region17: #{actor_forward.1} parent=1 // pred_fallthru
      _
    // Predicated region
    $region18: #{actor_forward.1} parent=1 // pred_check
      _
    $region19: #{actor_forward.1} parent=1 // pred_check_branch
      %38 = sbr.rel (0) target = $region21
    $region20: #{actor_forward.1} parent=1 // pred_region
      _
    $region21: #{actor_forward.1} parent=1 // pred_fallthru
      _
    // Predicated region
    $region22: #{actor_forward.1} parent=1 // pred_check
      _
    $region23: #{actor_forward.1} parent=1 // pred_check_branch
      %40 = sbr.rel (0) target = $region25
    $region24: #{actor_forward.1} parent=1 // pred_region
      _
    $region25: #{actor_forward.1} parent=1 // pred_fallthru
      _
    // Predicated region
    $region26: #{actor_forward.1} parent=1 // pred_check
      _
    $region27: #{actor_forward.1} parent=1 // pred_check_branch
      %42 = sbr.rel (0) target = $region29
    $region28: #{actor_forward.1} parent=1 // pred_region
      _
    $region29: #{actor_forward.1} parent=1 // pred_fallthru
      _
    // Predicated region
    $region30: #{actor_forward.1} parent=1 // pred_check
      _
    $region31: #{actor_forward.1} parent=1 // pred_check_branch
      %44 = sbr.rel (0) target = $region33
    $region32: #{actor_forward.1} parent=1 // pred_region
      _
    $region33: #{actor_forward.1} parent=1 // pred_fallthru
      _
    // Predicated region
    $region34: #{actor_forward.1} parent=1 // pred_check
      _
    $region35: #{actor_forward.1} parent=1 // pred_check_branch
      %46 = sbr.rel (0) target = $region37
    $region36: #{actor_forward.1} parent=1 // pred_region
      _
    $region37: #{actor_forward.1} parent=1 // pred_fallthru
      _
    // Predicated region
    $region38: #{actor_forward.1} parent=1 // pred_check
      _
    $region39: #{actor_forward.1} parent=1 // pred_check_branch
      %48 = sbr.rel (0) target = $region41
    $region40: #{actor_forward.1} parent=1 // pred_region
      %49 = dma.done [#allocation5], 1024
    $region41: #{actor_forward.1} parent=1 // pred_fallthru
      _
    %v50 = vld [vmem:[%s0] sm:$0xff]
    %v51 = vld [vmem:[%s1] sm:$0x1]
    %53 = vset.pattern.permute.xlu0 0
    %54 = vperm.xlu0 %53, %v50
    %v55 = vpop.permute.xlu0 %54
    %v57 = vlaneseq
    %v58 = vshrl.u32 %v57, 7
    %v59 = vsub.s32 0, %v58
    %v60 = vrot.slane %v51, %v59
    %v61 = vmul.f32 %v55, %v60
    %v62 = vld [vmem:[%s1 + $0x1] sm:$0x1]
    %63 = vset.pattern.permute.xlu0 1
    %64 = vperm.xlu0 %63, %v50
    %v65 = vpop.permute.xlu0 %64
    %v67 = vlaneseq
    %v68 = vshrl.u32 %v67, 7
    %v69 = vsub.s32 0, %v68
    %v70 = vrot.slane %v62, %v69
    %v71 = vmul.f32 %v65, %v70
    %v72 = vadd.f32 %v61, %v71
    %v73 = vld [vmem:[%s1 + $0x2] sm:$0x1]
    %74 = vset.pattern.permute.xlu0 2
    %75 = vperm.xlu0 %74, %v50
    %v76 = vpop.permute.xlu0 %75
    %v78 = vlaneseq
    %v79 = vshrl.u32 %v78, 7
    %v80 = vsub.s32 0, %v79
    %v81 = vrot.slane %v73, %v80
    %v82 = vmul.f32 %v76, %v81
    %v83 = vadd.f32 %v72, %v82
    %v84 = vld [vmem:[%s2] sm:$0x1]
    %v86 = vlaneseq
    %v87 = vshrl.u32 %v86, 7
    %v88 = vsub.s32 0, %v87
    %v89 = vrot.slane %v84, %v88
    %v91 = vadd.f32 %v83, %v89
    %v92 = vtanh.pop %v91
    %v93 = vld [vmem:[#allocation4] sm:$0xff]
    %v94 = vld [vmem:[#allocation4 + $0x8] sm:$0xff]
    %v95 = vld [vmem:[#allocation4 + $0x10] sm:$0xff]
    %v96 = vld [vmem:[#allocation4 + $0x18] sm:$0xff]
    %v97 = vld [vmem:[#allocation4 + $0x20] sm:$0xff]
    %v98 = vld [vmem:[#allocation4 + $0x28] sm:$0xff]
    %v99 = vld [vmem:[#allocation4 + $0x30] sm:$0xff]
    %v100 = vld [vmem:[#allocation4 + $0x38] sm:$0xff]
    %v101 = vld [vmem:[%s4] sm:$0x1]
    %v103 = vlaneseq
    %v104 = vshrl.u32 %v103, 7
    %v105 = vsub.s32 0, %v104
    %v106 = vrot.slane %v101, %v105
    %vm108 = vcmask 523264
    %v110 = vsel %vm108, %v92, 0
    %112 = vmatprep.subr.mxu0 0.0
    %113 = vmatpush1.msra.mxu0 %v93
    %114 = vmatprep.subr.mxu0 0.0
    %115 = vmatpush1.msra.mxu0 %v94
    %116 = vmatprep.subr.mxu0 0.0
    %117 = vmatpush1.msra.mxu0 %v95
    %118 = vmatprep.subr.mxu0 0.0
    %119 = vmatpush1.msra.mxu0 %v96
    %120 = vmatprep.subr.mxu0 0.0
    %121 = vmatpush1.msra.mxu0 %v97
    %122 = vmatprep.subr.mxu0 0.0
    %123 = vmatpush1.msra.mxu0 %v98
    %124 = vmatprep.subr.mxu0 0.0
    %125 = vmatpush1.msra.mxu0 %v99
    %126 = vmatprep.subr.mxu0 0.0
    %127 = vmatpush1.msra.mxu0 %v100
    %128 = vmatprep.subr.mxu0 0.0
    %129 = vmatpush1.msra.mxu0 0.0
    %130 = vmatprep.subr.mxu0 0.0
    %131 = vmatpush1.msra.mxu0 0.0
    %132 = vmatprep.subr.mxu0 0.0
    %133 = vmatpush1.msra.mxu0 0.0
    %134 = vmatprep.subr.mxu0 0.0
    %135 = vmatpush1.msra.mxu0 0.0
    %136 = vmatprep.subr.mxu0 0.0
    %137 = vmatpush1.msra.mxu0 0.0
    %138 = vmatprep.subr.mxu0 0.0
    %139 = vmatpush1.msra.mxu0 0.0
    %140 = vmatprep.subr.mxu0 0.0
    %141 = vmatpush1.msra.mxu0 0.0
    %142 = vmatprep.subr.mxu0 0.0
    %143 = vmatpush1.msra.mxu0 0.0
    %144 = vmatprep.subr.mxu0 0.0
    %145 = vmatpush1.msra.mxu0 0.0
    %146 = vmatprep.subr.mxu0 0.0
    %147 = vmatpush1.msra.mxu0 0.0
    %148 = vmatprep.subr.mxu0 0.0
    %149 = vmatpush1.msra.mxu0 0.0
    %150 = vmatprep.subr.mxu0 0.0
    %151 = vmatpush1.msra.mxu0 0.0
    %152 = vmatprep.subr.mxu0 0.0
    %153 = vmatpush1.msra.mxu0 0.0
    %154 = vmatprep.subr.mxu0 0.0
    %155 = vmatpush1.msra.mxu0 0.0
    %156 = vmatprep.subr.mxu0 0.0
    %157 = vmatpush1.msra.mxu0 0.0
    %158 = vmatprep.subr.mxu0 0.0
    %159 = vmatpush1.msra.mxu0 0.0
    %160 = vmatprep.subr.mxu0 0.0
    %161 = vmatpush1.msra.mxu0 0.0
    %162 = vmatprep.subr.mxu0 0.0
    %163 = vmatpush1.msra.mxu0 0.0
    %164 = vmatprep.subr.mxu0 0.0
    %165 = vmatpush1.msra.mxu0 0.0
    %166 = vmatprep.subr.mxu0 0.0
    %167 = vmatpush1.msra.mxu0 0.0
    %168 = vmatprep.subr.mxu0 0.0
    %169 = vmatpush1.msra.mxu0 0.0
    %170 = vmatprep.subr.mxu0 0.0
    %171 = vmatpush1.msra.mxu0 0.0
    %172 = vmatprep.subr.mxu0 0.0
    %173 = vmatpush1.msra.mxu0 0.0
    %174 = vmatprep.subr.mxu0 0.0
    %175 = vmatpush1.msra.mxu0 0.0
    %176 = vmatprep.mubr.f32.mxu0 0.0
    %177 = vmatmul.mubr.f32.gmra.mrb[0].mxu0 %v110
    %v178 = vpop.f32.mrb[0].mxu0
    %v179 = vadd.f32 %v106, %v178
    %v180 = vpop.f32.mrb[0].mxu0
    %181 = vdwg.mxu0
    %v182 = vtanh.pop %v179
    %v183 = vld [vmem:[%s5] sm:$0x1]
    %v185 = vlaneseq
    %v186 = vshrl.u32 %v185, 7
    %v187 = vsub.s32 0, %v186
    %v188 = vrot.slane %v183, %v187
    %v190 = vmul.f32 %v182, %v188
    %v191 = vsel %vm108, %v190, 0.0
    %192 = vadd.xlane.f32.xlu0 %v191
    %v193 = vpop.xlane.xlu0 %192
    %v194 = vld [vmem:[#allocation2] sm:$0x1]
    %v196 = vlaneseq
    %v197 = vshrl.u32 %v196, 7
    %v198 = vsub.s32 0, %v197
    %v199 = vrot.slane %v194, %v198
    %v201 = vadd.f32 %v193, %v199
    %v202 = vld [vmem:[#allocation3] sm:$0x1]
    %v203 = vld [vmem:[%s8] sm:$0xff]
    %v205 = vlaneseq
    %v206 = vshrl.u32 %v205, 7
    %v207 = vsub.s32 0, %v206
    %v208 = vrot.slane %v202, %v207
    %v210 = vmul.f32 %v208, %v203
    %v211 = vadd.f32 %v201, %v210
    %v212 = vtanh.pop %v211
    %v213 = vmul.f32 %v212, 2.0
    %v214 = vlaneseq
    %v215 = vand.u32 %v214, 127
    %vm216 = vcmp.eq.s32.totalorder %v215, 0
    %218 = vset.pattern.permute.xlu0 0
    %219 = vperm.xlu0 %218, %v213
    %v220 = vpop.permute.xlu0 %219
    %v222 = vsel %vm216, %v220, 0.0
    %vm223 = vcmp.eq.s32.totalorder %v215, 1
    %225 = vset.pattern.permute.xlu0 0
    %226 = vperm.xlu0 %225, %v211
    %v227 = vpop.permute.xlu0 %226
    %v229 = vsel %vm223, %v227, %v222
    %vm230 = vcmp.eq.s32.totalorder %v215, 2
    %232 = vset.pattern.permute.xlu0 0
    %233 = vperm.xlu0 %232, %v201
    %v234 = vpop.permute.xlu0 %233
    %v236 = vsel %vm230, %v234, %v229
    %237 = vst [vmem:[%s9] sm:$0xff] %v236
    // Predicated region
    $region42: #{actor_forward.1} parent=1 // pred_check
      _
    $region43: #{actor_forward.1} parent=1 // pred_check_branch
      %239 = sbr.rel (0) target = $region45
    $region44: #{actor_forward.1} parent=1 // pred_region
      _
    $region45: #{actor_forward.1} parent=1 // pred_fallthru
      _
    // Predicated region
    $region46: #{actor_forward.1} parent=1 // pred_check
      _
    $region47: #{actor_forward.1} parent=1 // pred_check_branch
      %241 = sbr.rel (0) target = $region49
    $region48: #{actor_forward.1} parent=1 // pred_region
      _
    $region49: #{actor_forward.1} parent=1 // pred_fallthru
      _
    %242 = vsyncpa [#allocation5], 1

</llo_original>
